<compile_context>
chip_gen: v7x
topology: tpu7x:2x2x1
jax: 0.10.0
libtpu: 0.0.40
codegen_flags: <defaults>
</compile_context>

<pallas_src>
import math
from functools import partial

import jax
import jax.numpy as jnp
from jax import lax
from jax.experimental import pallas as pl
from jax.experimental.pallas import tpu as pltpu


def _round_up(x, m):
    return ((x + m - 1) // m) * m


def _fib_kernel(p_ref, w_ref, b_ref, g_ref, beta_ref, o_ref, *, c_real):
    # conv lowered to im2col + matmul on the MXU; always accumulate in f32.
    x = jnp.dot(p_ref[...], w_ref[...], preferred_element_type=jnp.float32)
    x = x + b_ref[...].astype(jnp.float32)                      # (TN, C) + (1, C)

    # exact GELU (erf-based), matching nn.GELU() default
    inv_sqrt2 = jnp.float32(1.0 / math.sqrt(2.0))
    x = jnp.float32(0.5) * x * (jnp.float32(1.0) + lax.erf(x * inv_sqrt2))

    # LayerNorm over embed_dim: one-pass sum / sum-of-squares in f32.
    inv_c = jnp.float32(1.0 / c_real)
    s = jnp.sum(x, axis=-1, keepdims=True)
    sq = jnp.sum(x * x, axis=-1, keepdims=True)
    mean = s * inv_c
    var = sq * inv_c - mean * mean
    xn = (x - mean) * lax.rsqrt(var + jnp.float32(1e-5))
    y = xn * g_ref[...].astype(jnp.float32) + beta_ref[...].astype(jnp.float32)
    o_ref[...] = y.astype(o_ref.dtype)


def feature_incentive_block(x, conv_w, conv_b, ln_g, ln_b, *,
                            patch_size, stride,
                            block_n=1024, compute_dtype=None, out_dtype=None):
    """x: (B, Cin, H, W) NCHW.  Returns (tokens (B, Ho*Wo, embed_dim), Ho, Wo)."""
    B, Cin, H, W = x.shape
    embed_dim = conv_w.shape[0]
    k = patch_size
    pad = k // 2
    K = Cin * k * k

    # Patch extraction straight into token-major layout (B, Ho, Wo, Cin*kh*kw).
    # Feature ordering is channel-major, matching the OIHW weight flattening.
    patches = lax.conv_general_dilated_patches(
        x, (k, k), (stride, stride), ((pad, pad), (pad, pad)),
        dimension_numbers=("NCHW", "OIHW", "NHWC"))
    _, Ho, Wo, Kp = patches.shape
    assert Kp == K
    N = B * Ho * Wo
    patches = patches.reshape(N, K)                 # contiguous, free reshape

    if compute_dtype is not None:                   # e.g. bf16 to halve patch traffic
        patches = patches.astype(compute_dtype)
    in_dtype = patches.dtype

    w_flat = conv_w.reshape(embed_dim, K).T.astype(in_dtype)      # (K, C)
    b_p = conv_b.reshape(1, embed_dim)
    g_p = ln_g.reshape(1, embed_dim)
    beta_p = ln_b.reshape(1, embed_dim)

    out_dtype = out_dtype if out_dtype is not None else x.dtype

    tn = min(block_n, _round_up(N, 8))              # token tile, multiple of 8
    grid = (pl.cdiv(N, tn),)

    cost = pl.CostEstimate(
        flops=2 * N * K * embed_dim,
        transcendentals=N * embed_dim,
        bytes_accessed=(patches.size * patches.dtype.itemsize
                        + w_flat.size * w_flat.dtype.itemsize
                        + N * embed_dim * jnp.dtype(out_dtype).itemsize))

    # VMEM per step (f32, tn=1024, K=147, C=32):
    #   2x patches tile ~1.2 MiB + pinned weight/params ~80 KiB + 2x out tile
    #   (lane-padded) ~1 MiB  -> well inside the scoped-VMEM default; no override.
    out = pl.pallas_call(
        partial(_fib_kernel, c_real=embed_dim),
        out_shape=jax.ShapeDtypeStruct((N, embed_dim), out_dtype),
        grid=grid,
        in_specs=[
            pl.BlockSpec((tn, K), lambda i: (i, 0)),          # streamed patches
            pl.BlockSpec((K, embed_dim), lambda i: (0, 0)),   # pinned weight
            pl.BlockSpec((1, embed_dim), lambda i: (0, 0)),   # conv bias
            pl.BlockSpec((1, embed_dim), lambda i: (0, 0)),   # LN gamma
            pl.BlockSpec((1, embed_dim), lambda i: (0, 0)),   # LN beta
        ],
        out_specs=pl.BlockSpec((tn, embed_dim), lambda i: (i, 0)),
        compiler_params=pltpu.CompilerParams(
            dimension_semantics=("parallel",)),
        cost_estimate=cost,
    )(patches, w_flat, b_p, g_p, beta_p)

    out = out.reshape(B, Ho * Wo, embed_dim)
    return out, Ho, Wo


def _reference(x, conv_w, conv_b, ln_g, ln_b, *, patch_size, stride):
    pad = patch_size // 2
    y = lax.conv_general_dilated(
        x, conv_w, window_strides=(stride, stride),
        padding=((pad, pad), (pad, pad)),
        dimension_numbers=("NCHW", "OIHW", "NCHW"))
    y = y + conv_b[None, :, None, None]
    B, C, Ho, Wo = y.shape
    y = y.reshape(B, C, Ho * Wo).transpose(0, 2, 1)           # (B, N, C)
    y = jax.nn.gelu(y, approximate=False)
    mean = jnp.mean(y, axis=-1, keepdims=True)
    var = jnp.mean((y - mean) ** 2, axis=-1, keepdims=True)
    y = (y - mean) * lax.rsqrt(var + 1e-5) * ln_g + ln_b
    return y, Ho, Wo


if __name__ == "__main__":
    # small shapes consistent with the module's forward
    B, in_chans, img = 2, 3, 16
    patch_size, stride, embed_dim = 7, 4, 32

    key = jax.random.PRNGKey(0)
    kx, kw = jax.random.split(key)

    x = jax.random.normal(kx, (B, in_chans, img, img), dtype=jnp.float32)

    # deterministic init mirroring _init_weights:
    # Conv2d: weight ~ N(0, sqrt(2 / fan_out)), fan_out = kh*kw*out_channels; bias = 0
    fan_out = patch_size * patch_size * embed_dim
    conv_w = jax.random.normal(
        kw, (embed_dim, in_chans, patch_size, patch_size),
        dtype=jnp.float32) * math.sqrt(2.0 / fan_out)
    conv_b = jnp.zeros((embed_dim,), jnp.float32)
    # LayerNorm: weight = 1, bias = 0
    ln_g = jnp.ones((embed_dim,), jnp.float32)
    ln_b = jnp.zeros((embed_dim,), jnp.float32)

    out, H, W = feature_incentive_block(
        x, conv_w, conv_b, ln_g, ln_b, patch_size=patch_size, stride=stride)
    out = jax.block_until_ready(out)

    ref, Hr, Wr = _reference(
        x, conv_w, conv_b, ln_g, ln_b, patch_size=patch_size, stride=stride)
    assert (H, W) == (Hr, Wr)
    assert out.shape == ref.shape == (B, H * W, embed_dim)
    assert jnp.allclose(out, ref, atol=1e-4, rtol=1e-4), float(
        jnp.max(jnp.abs(out - ref)))

    print("KERNEL_OK")
</pallas_src>

<mosaic_0001>
module attributes {stable_mosaic.version = 11 : i64} {
  func.func @_fib_kernel(%arg0: i32, %arg1: memref<32x147xf32, #tpu.memory_space<vmem>>, %arg2: memref<147x32xf32, #tpu.memory_space<vmem>>, %arg3: memref<1x32xf32, #tpu.memory_space<vmem>>, %arg4: memref<1x32xf32, #tpu.memory_space<vmem>>, %arg5: memref<1x32xf32, #tpu.memory_space<vmem>>, %arg6: memref<32x32xf32, #tpu.memory_space<vmem>>) attributes {dimension_semantics = [#tpu.dimension_semantics<parallel>], iteration_bounds = array<i64: 1>, scalar_prefetch = 0 : i64, scratch_operands = 0 : i64, tpu.core_type = #tpu.core_type<tc>, window_params = [{transform_indices = @transform_0, window_bounds = array<i64: 32, 147>}, {pipeline_mode = #tpu.pipeline_mode<synchronous>, transform_indices = @transform_1, window_bounds = array<i64: 147, 32>}, {pipeline_mode = #tpu.pipeline_mode<synchronous>, transform_indices = @transform_2, window_bounds = array<i64: 1, 32>}, {pipeline_mode = #tpu.pipeline_mode<synchronous>, transform_indices = @transform_3, window_bounds = array<i64: 1, 32>}, {pipeline_mode = #tpu.pipeline_mode<synchronous>, transform_indices = @transform_4, window_bounds = array<i64: 1, 32>}, {transform_indices = @transform_5, window_bounds = array<i64: 32, 32>}]} {
    %c0 = arith.constant 0 : index
    %c0_0 = arith.constant 0 : index
    %0 = vector.load %arg1[%c0, %c0_0] : memref<32x147xf32, #tpu.memory_space<vmem>>, vector<32x147xf32>
    %c0_1 = arith.constant 0 : index
    %c0_2 = arith.constant 0 : index
    %1 = vector.load %arg2[%c0_1, %c0_2] : memref<147x32xf32, #tpu.memory_space<vmem>>, vector<147x32xf32>
    %cst = arith.constant dense<0.000000e+00> : vector<32x32xf32>
    %2 = tpu.matmul %0, %1, %cst {dimension_numbers = #tpu.dot_dimension_numbers<[1], [0], [0], [1], [0, 0, 1, 1], [], []>} : vector<32x147xf32>, vector<147x32xf32>, vector<32x32xf32> -> vector<32x32xf32>
    %c0_3 = arith.constant 0 : index
    %c0_4 = arith.constant 0 : index
    %3 = vector.load %arg3[%c0_3, %c0_4] : memref<1x32xf32, #tpu.memory_space<vmem>>, vector<1x32xf32>
    %4 = vector.broadcast %3 : vector<1x32xf32> to vector<32x32xf32>
    %5 = arith.addf %2, %4 : vector<32x32xf32>
    %cst_5 = arith.constant 5.000000e-01 : f32
    %6 = vector.broadcast %cst_5 : f32 to vector<32x32xf32>
    %7 = arith.mulf %6, %5 : vector<32x32xf32>
    %cst_6 = arith.constant 0.707106769 : f32
    %8 = vector.broadcast %cst_6 : f32 to vector<32x32xf32>
    %9 = arith.mulf %5, %8 : vector<32x32xf32>
    %10 = math.erf %9 : vector<32x32xf32>
    %cst_7 = arith.constant 1.000000e+00 : f32
    %11 = vector.broadcast %cst_7 : f32 to vector<32x32xf32>
    %12 = arith.addf %11, %10 : vector<32x32xf32>
    %13 = arith.mulf %7, %12 : vector<32x32xf32>
    %cst_8 = arith.constant dense<0.000000e+00> : vector<32xf32>
    %14 = vector.multi_reduction <add>, %13, %cst_8 [1] : vector<32x32xf32> to vector<32xf32>
    %15 = vector.shape_cast %14 : vector<32xf32> to vector<32x1xf32>
    %16 = arith.mulf %13, %13 : vector<32x32xf32>
    %cst_9 = arith.constant dense<0.000000e+00> : vector<32xf32>
    %17 = vector.multi_reduction <add>, %16, %cst_9 [1] : vector<32x32xf32> to vector<32xf32>
    %18 = vector.shape_cast %17 : vector<32xf32> to vector<32x1xf32>
    %cst_10 = arith.constant 3.125000e-02 : f32
    %19 = vector.broadcast %cst_10 : f32 to vector<32x1xf32>
    %20 = arith.mulf %15, %19 : vector<32x1xf32>
    %cst_11 = arith.constant 3.125000e-02 : f32
    %21 = vector.broadcast %cst_11 : f32 to vector<32x1xf32>
    %22 = arith.mulf %18, %21 : vector<32x1xf32>
    %23 = arith.mulf %20, %20 : vector<32x1xf32>
    %24 = arith.subf %22, %23 : vector<32x1xf32>
    %25 = vector.broadcast %20 : vector<32x1xf32> to vector<32x32xf32>
    %26 = arith.subf %13, %25 : vector<32x32xf32>
    %cst_12 = arith.constant 9.99999974E-6 : f32
    %27 = vector.broadcast %cst_12 : f32 to vector<32x1xf32>
    %28 = arith.addf %24, %27 : vector<32x1xf32>
    %29 = math.rsqrt %28 : vector<32x1xf32>
    %30 = vector.broadcast %29 : vector<32x1xf32> to vector<32x32xf32>
    %31 = arith.mulf %26, %30 : vector<32x32xf32>
    %c0_13 = arith.constant 0 : index
    %c0_14 = arith.constant 0 : index
    %32 = vector.load %arg4[%c0_13, %c0_14] : memref<1x32xf32, #tpu.memory_space<vmem>>, vector<1x32xf32>
    %33 = vector.broadcast %32 : vector<1x32xf32> to vector<32x32xf32>
    %34 = arith.mulf %31, %33 : vector<32x32xf32>
    %c0_15 = arith.constant 0 : index
    %c0_16 = arith.constant 0 : index
    %35 = vector.load %arg5[%c0_15, %c0_16] : memref<1x32xf32, #tpu.memory_space<vmem>>, vector<1x32xf32>
    %36 = vector.broadcast %35 : vector<1x32xf32> to vector<32x32xf32>
    %37 = arith.addf %34, %36 : vector<32x32xf32>
    %c0_17 = arith.constant 0 : index
    %c0_18 = arith.constant 0 : index
    %38 = vector.load %arg6[%c0_17, %c0_18] : memref<32x32xf32, #tpu.memory_space<vmem>>, vector<32x32xf32>
    tpu.vector_store %arg6[%c0_17, %c0_18], %37 {strides = array<i32>} : memref<32x32xf32, #tpu.memory_space<vmem>>, vector<32x32xf32>,
    return
  }
  func.func @transform_0(%arg0: i32) -> (i32, i32) {
    %c0_i32 = arith.constant 0 : i32
    %c0_i32_0 = arith.constant 0 : i32
    return %arg0, %c0_i32 : i32, i32
  }
  func.func @transform_1(%arg0: i32) -> (i32, i32) {
    %c0_i32 = arith.constant 0 : i32
    %c0_i32_0 = arith.constant 0 : i32
    %c0_i32_1 = arith.constant 0 : i32
    return %c0_i32, %c0_i32_0 : i32, i32
  }
  func.func @transform_2(%arg0: i32) -> (i32, i32) {
    %c0_i32 = arith.constant 0 : i32
    %c0_i32_0 = arith.constant 0 : i32
    %c0_i32_1 = arith.constant 0 : i32
    return %c0_i32, %c0_i32_0 : i32, i32
  }
  func.func @transform_3(%arg0: i32) -> (i32, i32) {
    %c0_i32 = arith.constant 0 : i32
    %c0_i32_0 = arith.constant 0 : i32
    %c0_i32_1 = arith.constant 0 : i32
    return %c0_i32, %c0_i32_0 : i32, i32
  }
  func.func @transform_4(%arg0: i32) -> (i32, i32) {
    %c0_i32 = arith.constant 0 : i32
    %c0_i32_0 = arith.constant 0 : i32
    %c0_i32_1 = arith.constant 0 : i32
    return %c0_i32, %c0_i32_0 : i32, i32
  }
  func.func @transform_5(%arg0: i32) -> (i32, i32) {
    %c0_i32 = arith.constant 0 : i32
    %c0_i32_0 = arith.constant 0 : i32
    return %arg0, %c0_i32 : i32, i32
  }
}

</mosaic_0001>

<llo_original>
// kernel: tpu_custom_call.1
$region0: #{tpu_custom_call.1}
  #allocation0 [shape = 'u32[]', space=smem, size = 0x4, offset = 0x4, fixed_abs, tag = 'smem constant byte address 0x4 - core index']
  #allocation1 [shape = 'u32[144,128]{1,0:T(1,128)}', space=vmem, size = 0x12000, scoped, tag = 'internal scratch']
  %s0 = inlined_call_operand.vmem [shape: f32[32,147], index: 0, kind: input, shape index: {}]
  %s1 = inlined_call_operand.vmem [shape: f32[147,32], index: 1, kind: input, shape index: {}]
  %s2 = inlined_call_operand.vmem [shape: f32[1,32], index: 2, kind: input, shape index: {}]
  %s3 = inlined_call_operand.vmem [shape: f32[1,32], index: 3, kind: input, shape index: {}]
  %s4 = inlined_call_operand.vmem [shape: f32[1,32], index: 4, kind: input, shape index: {}]
  %s5 = inlined_call_operand.hbm [shape: f32[32,32], index: 5, kind: output, shape index: {}]
  %s6 = sld [smem:[#allocation0]]
  $region30: #{tpu_custom_call.1} parent=0
    _
  %s8 = ssub.s32 1, %s6
  %s9 = scalar_select 0, %s8, %s6
  $region1: #{tpu_custom_call.1} parent=0
    #allocation2 [shape = 'u8[16384]{0}', space=vmem, size = 0x4000, scoped, tag = 'output window, operand 0, single buffered']
    #allocation3 [shape = 's32[1]{0}', space=sflag, size = 0x4, scoped, tag = 'scoped memory for tpu_custom_call.1']
    %10 = vsyncpa [#allocation3], 0
    // Predicated region
    $region2: #{tpu_custom_call.1} parent=1 // pred_check
      _
    $region3: #{tpu_custom_call.1} parent=1 // pred_check_branch
      %12 = sbr.rel (0) target = $region5
    $region4: #{tpu_custom_call.1} parent=1 // pred_region
      _
    $region5: #{tpu_custom_call.1} parent=1 // pred_fallthru
      _
    // Predicated region
    $region6: #{tpu_custom_call.1} parent=1 // pred_check
      _
    $region7: #{tpu_custom_call.1} parent=1 // pred_check_branch
      %14 = sbr.rel (0) target = $region9
    $region8: #{tpu_custom_call.1} parent=1 // pred_region
      _
    $region9: #{tpu_custom_call.1} parent=1 // pred_fallthru
      _
    // Predicated region
    $region10: #{tpu_custom_call.1} parent=1 // pred_check
      _
    $region11: #{tpu_custom_call.1} parent=1 // pred_check_branch
      %16 = sbr.rel (0) target = $region13
    $region12: #{tpu_custom_call.1} parent=1 // pred_region
      _
    $region13: #{tpu_custom_call.1} parent=1 // pred_fallthru
      _
    // Predicated region
    $region14: #{tpu_custom_call.1} parent=1 // pred_check
      _
    $region15: #{tpu_custom_call.1} parent=1 // pred_check_branch
      %18 = sbr.rel (0) target = $region17
    $region16: #{tpu_custom_call.1} parent=1 // pred_region
      _
    $region17: #{tpu_custom_call.1} parent=1 // pred_fallthru
      _
    // Predicated region
    $region18: #{tpu_custom_call.1} parent=1 // pred_check
      _
    $region19: #{tpu_custom_call.1} parent=1 // pred_check_branch
      %20 = sbr.rel (0) target = $region21
    $region20: #{tpu_custom_call.1} parent=1 // pred_region
      _
    $region21: #{tpu_custom_call.1} parent=1 // pred_fallthru
      _
    %v21 = vld [vmem:[%s0] sm:$0xff]
    %v22 = vld [vmem:[%s0 + $0x8] sm:$0xff]
    %v23 = vld [vmem:[%s0 + $0x10] sm:$0xff]
    %v24 = vld [vmem:[%s0 + $0x18] sm:$0xff]
    %v25 = vld [vmem:[%s0 + $0x20] sm:$0xff]
    %v26 = vld [vmem:[%s0 + $0x28] sm:$0xff]
    %v27 = vld [vmem:[%s0 + $0x30] sm:$0xff]
    %v28 = vld [vmem:[%s0 + $0x38] sm:$0xff]
    %v29 = vld [vmem:[%s1] sm:$0xff]
    %v30 = vld [vmem:[%s1 + $0x8] sm:$0xff]
    %v31 = vld [vmem:[%s1 + $0x10] sm:$0xff]
    %v32 = vld [vmem:[%s1 + $0x18] sm:$0xff]
    %v33 = vld [vmem:[%s1 + $0x20] sm:$0xff]
    %v34 = vld [vmem:[%s1 + $0x28] sm:$0xff]
    %v35 = vld [vmem:[%s1 + $0x30] sm:$0xff]
    %v36 = vld [vmem:[%s1 + $0x38] sm:$0xff]
    %v37 = vld [vmem:[%s1 + $0x40] sm:$0xff]
    %v38 = vld [vmem:[%s1 + $0x48] sm:$0xff]
    %v39 = vld [vmem:[%s1 + $0x50] sm:$0xff]
    %v40 = vld [vmem:[%s1 + $0x58] sm:$0xff]
    %v41 = vld [vmem:[%s1 + $0x60] sm:$0xff]
    %v42 = vld [vmem:[%s1 + $0x68] sm:$0xff]
    %v43 = vld [vmem:[%s1 + $0x70] sm:$0xff]
    %v44 = vld [vmem:[%s1 + $0x78] sm:$0xff]
    %v45 = vld [vmem:[%s1 + $0x80] sm:$0xff]
    %v46 = vld [vmem:[%s1 + $0x88] sm:$0xff]
    %v47 = vld [vmem:[%s1 + $0x90] sm:$0x7]
    %v48 = vld [vmem:[%s2] sm:$0x1]
    %v50 = vlaneseq
    %v51 = vshrl.u32 %v50, 7
    %v52 = vsub.s32 0, %v51
    %v53 = vrot.slane %v48, %v52
    %vm55 = vcmask 154624
    %v57 = vsel %vm55, %v22, 0
    %v60 = vsel %vm55, %v24, 0
    %v63 = vsel %vm55, %v26, 0
    %v66 = vsel %vm55, %v28, 0
    %vm68 = vcmask 1042432
    %v70 = vsel %vm68, %v47, 0
    %72 = vmatprep.subr.mxu0 0.0
    %73 = vmatpush1.msra.mxu0 %v29
    %74 = vmatprep.subr.mxu0 0.0
    %75 = vmatpush1.msra.mxu0 %v30
    %76 = vmatprep.subr.mxu0 0.0
    %77 = vmatpush1.msra.mxu0 %v31
    %78 = vmatprep.subr.mxu0 0.0
    %79 = vmatpush1.msra.mxu0 %v32
    %80 = vmatprep.subr.mxu0 0.0
    %81 = vmatpush1.msra.mxu0 %v33
    %82 = vmatprep.subr.mxu0 0.0
    %83 = vmatpush1.msra.mxu0 %v34
    %84 = vmatprep.subr.mxu0 0.0
    %85 = vmatpush1.msra.mxu0 %v35
    %86 = vmatprep.subr.mxu0 0.0
    %87 = vmatpush1.msra.mxu0 %v36
    %88 = vmatprep.subr.mxu0 0.0
    %89 = vmatpush1.msra.mxu0 %v37
    %90 = vmatprep.subr.mxu0 0.0
    %91 = vmatpush1.msra.mxu0 %v38
    %92 = vmatprep.subr.mxu0 0.0
    %93 = vmatpush1.msra.mxu0 %v39
    %94 = vmatprep.subr.mxu0 0.0
    %95 = vmatpush1.msra.mxu0 %v40
    %96 = vmatprep.subr.mxu0 0.0
    %97 = vmatpush1.msra.mxu0 %v41
    %98 = vmatprep.subr.mxu0 0.0
    %99 = vmatpush1.msra.mxu0 %v42
    %100 = vmatprep.subr.mxu0 0.0
    %101 = vmatpush1.msra.mxu0 %v43
    %102 = vmatprep.subr.mxu0 0.0
    %103 = vmatpush1.msra.mxu0 %v44
    %104 = vmatprep.subr.mxu0 0.0
    %105 = vmatpush1.msra.mxu0 %v45
    %106 = vmatprep.subr.mxu0 0.0
    %107 = vmatpush1.msra.mxu0 %v46
    %108 = vmatprep.subr.mxu0 0.0
    %109 = vmatpush1.msra.mxu0 %v70
    %110 = vmatprep.subr.mxu0 0.0
    %111 = vmatpush1.msra.mxu0 0.0
    %112 = vmatprep.subr.mxu0 0.0
    %113 = vmatpush1.msra.mxu0 0.0
    %114 = vmatprep.subr.mxu0 0.0
    %115 = vmatpush1.msra.mxu0 0.0
    %116 = vmatprep.subr.mxu0 0.0
    %117 = vmatpush1.msra.mxu0 0.0
    %118 = vmatprep.subr.mxu0 0.0
    %119 = vmatpush1.msra.mxu0 0.0
    %120 = vmatprep.subr.mxu0 0.0
    %121 = vmatpush1.msra.mxu0 0.0
    %122 = vmatprep.subr.mxu0 0.0
    %123 = vmatpush1.msra.mxu0 0.0
    %124 = vmatprep.subr.mxu0 0.0
    %125 = vmatpush1.msra.mxu0 0.0
    %126 = vmatprep.subr.mxu0 0.0
    %127 = vmatpush1.msra.mxu0 0.0
    %128 = vmatprep.subr.mxu0 0.0
    %129 = vmatpush1.msra.mxu0 0.0
    %130 = vmatprep.subr.mxu0 0.0
    %131 = vmatpush1.msra.mxu0 0.0
    %132 = vmatprep.subr.mxu0 0.0
    %133 = vmatpush1.msra.mxu0 0.0
    %134 = vmatprep.subr.mxu0 0.0
    %135 = vmatpush1.msra.mxu0 0.0
    %136 = vmatprep.mubr.f32.mxu0 %v57
    %137 = vmatmul.mubr.f32.gmra.mrb[0].mxu0 %v21
    %v138 = vpop.f32.mrb[0].mxu0
    %v139 = vadd.f32 %v53, %v138
    %v140 = vpop.f32.mrb[0].mxu0
    %141 = vmatprep.mubr.f32.mxu0 %v60
    %142 = vmatmul.mubr.f32.gmra.mrb[0].mxu0 %v23
    %v143 = vpop.f32.mrb[0].mxu0
    %v144 = vadd.f32 %v53, %v143
    %v145 = vpop.f32.mrb[0].mxu0
    %146 = vmatprep.mubr.f32.mxu0 %v63
    %147 = vmatmul.mubr.f32.gmra.mrb[0].mxu0 %v25
    %v148 = vpop.f32.mrb[0].mxu0
    %v149 = vadd.f32 %v53, %v148
    %v150 = vpop.f32.mrb[0].mxu0
    %151 = vmatprep.mubr.f32.mxu0 %v66
    %152 = vmatmul.mubr.f32.gmra.mrb[0].mxu0 %v27
    %v153 = vpop.f32.mrb[0].mxu0
    %v154 = vadd.f32 %v53, %v153
    %v155 = vpop.f32.mrb[0].mxu0
    %156 = vdwg.mxu0
    %v157 = vmul.f32 %v139, 0.5
    %v158 = vmul.f32 %v144, 0.5
    %v159 = vmul.f32 %v149, 0.5
    %v160 = vmul.f32 %v154, 0.5
    %v161 = vmul.f32 %v139, 0.70710677
    %v162 = vmul.f32 %v144, 0.70710677
    %v163 = vmul.f32 %v149, 0.70710677
    %v164 = vmul.f32 %v154, 0.70710677
    %v165 = verf.f32.pop %v161
    %v166 = verf.f32.pop %v162
    %v167 = verf.f32.pop %v163
    %v168 = verf.f32.pop %v164
    %v169 = vadd.f32 %v165, 1.0
    %v170 = vadd.f32 %v166, 1.0
    %v171 = vadd.f32 %v167, 1.0
    %v172 = vadd.f32 %v168, 1.0
    %v173 = vmul.f32 %v157, %v169
    %v174 = vmul.f32 %v158, %v170
    %v175 = vmul.f32 %v159, %v171
    %v176 = vmul.f32 %v160, %v172
    %vm177 = vcmask 261120
    %v178 = vsel %vm177, %v173, 0.0
    %179 = vadd.xlane.f32.xlu0 %v178
    %v180 = vpop.xlane.xlu0 %179
    %v181 = vsel %vm177, %v174, 0.0
    %182 = vadd.xlane.f32.xlu0 %v181
    %v183 = vpop.xlane.xlu0 %182
    %v184 = vsel %vm177, %v175, 0.0
    %185 = vadd.xlane.f32.xlu0 %v184
    %v186 = vpop.xlane.xlu0 %185
    %v187 = vsel %vm177, %v176, 0.0
    %188 = vadd.xlane.f32.xlu0 %v187
    %v189 = vpop.xlane.xlu0 %188
    %v190 = vmul.f32 %v173, %v173
    %v191 = vmul.f32 %v174, %v174
    %v192 = vmul.f32 %v175, %v175
    %v193 = vmul.f32 %v176, %v176
    %v194 = vsel %vm177, %v190, 0.0
    %195 = vadd.xlane.f32.xlu0 %v194
    %v196 = vpop.xlane.xlu0 %195
    %v197 = vsel %vm177, %v191, 0.0
    %198 = vadd.xlane.f32.xlu0 %v197
    %v199 = vpop.xlane.xlu0 %198
    %v200 = vsel %vm177, %v192, 0.0
    %201 = vadd.xlane.f32.xlu0 %v200
    %v202 = vpop.xlane.xlu0 %201
    %v203 = vsel %vm177, %v193, 0.0
    %204 = vadd.xlane.f32.xlu0 %v203
    %v205 = vpop.xlane.xlu0 %204
    %v206 = vmul.f32 %v180, 0.03125
    %v207 = vmul.f32 %v183, 0.03125
    %v208 = vmul.f32 %v186, 0.03125
    %v209 = vmul.f32 %v189, 0.03125
    %v210 = vmul.f32 %v196, 0.03125
    %v211 = vmul.f32 %v199, 0.03125
    %v212 = vmul.f32 %v202, 0.03125
    %v213 = vmul.f32 %v205, 0.03125
    %v214 = vmul.f32 %v206, %v206
    %v215 = vmul.f32 %v207, %v207
    %v216 = vmul.f32 %v208, %v208
    %v217 = vmul.f32 %v209, %v209
    %v218 = vsub.f32 %v210, %v214
    %v219 = vsub.f32 %v211, %v215
    %v220 = vsub.f32 %v212, %v216
    %v221 = vsub.f32 %v213, %v217
    %v222 = vsub.f32 %v173, %v206
    %v223 = vsub.f32 %v174, %v207
    %v224 = vsub.f32 %v175, %v208
    %v225 = vsub.f32 %v176, %v209
    %v226 = vadd.f32 %v218, 1e-05
    %v227 = vadd.f32 %v219, 1e-05
    %v228 = vadd.f32 %v220, 1e-05
    %v229 = vadd.f32 %v221, 1e-05
    %v230 = vrsqrt.pop %v226
    %v231 = vrsqrt.pop %v227
    %v232 = vrsqrt.pop %v228
    %v233 = vrsqrt.pop %v229
    %v234 = vmul.f32 %v222, %v230
    %v235 = vmul.f32 %v223, %v231
    %v236 = vmul.f32 %v224, %v232
    %v237 = vmul.f32 %v225, %v233
    %v238 = vld [vmem:[%s3] sm:$0x1]
    %v240 = vlaneseq
    %v241 = vshrl.u32 %v240, 7
    %v242 = vsub.s32 0, %v241
    %v243 = vrot.slane %v238, %v242
    %v245 = vmul.f32 %v234, %v243
    %v246 = vmul.f32 %v235, %v243
    %v247 = vmul.f32 %v236, %v243
    %v248 = vmul.f32 %v237, %v243
    %v249 = vld [vmem:[%s4] sm:$0x1]
    %v251 = vlaneseq
    %v252 = vshrl.u32 %v251, 7
    %v253 = vsub.s32 0, %v252
    %v254 = vrot.slane %v249, %v253
    %v256 = vadd.f32 %v245, %v254
    %v257 = vadd.f32 %v246, %v254
    %v258 = vadd.f32 %v247, %v254
    %v259 = vadd.f32 %v248, %v254
    %260 = vst.msk [vmem:[#allocation2] sm:$0xff] %vm177, %v256
    %261 = vst.msk [vmem:[#allocation2 + $0x8] sm:$0xff] %vm177, %v257
    %262 = vst.msk [vmem:[#allocation2 + $0x10] sm:$0xff] %vm177, %v258
    %263 = vst.msk [vmem:[#allocation2 + $0x18] sm:$0xff] %vm177, %v259
    // Predicated region
    $region22: #{tpu_custom_call.1} parent=1 // pred_check
      _
    $region23: #{tpu_custom_call.1} parent=1 // pred_check_branch
      %265 = sbr.rel (0) target = $region25
    $region24: #{tpu_custom_call.1} parent=1 // pred_region
      %s267 = ssub.s32 512, 512
      %268 = vsyncadd [#allocation3], %s267
      %s269 = sshll.u32 [#allocation2], 4
      %s270 = int_to_ptr.vmem [resolvable:$true] %s269
      %275 = dma.vmem_to_hbm [thread:$0]  %s270, 512, %s5, [#allocation3], 128, 128, 8
    $region25: #{tpu_custom_call.1} parent=1 // pred_fallthru
      _
    // Predicated region
    $region26: #{tpu_custom_call.1} parent=1 // pred_check
      _
    $region27: #{tpu_custom_call.1} parent=1 // pred_check_branch
      %277 = sbr.rel (0) target = $region29
    $region28: #{tpu_custom_call.1} parent=1 // pred_region
      %278 = dma.done [#allocation3], 512
    $region29: #{tpu_custom_call.1} parent=1 // pred_fallthru
      _
    %279 = vsyncpa [#allocation3], 1

</llo_original>
